<compile_context>
chip_gen: v6e
topology: v6e:2x2x1
jax: 0.10.0
libtpu: 0.0.40
codegen_flags: <defaults>
</compile_context>

<pallas_src>
import functools

import jax
import jax.numpy as jnp
from jax import lax
from jax.experimental import pallas as pl
from jax.experimental.pallas import tpu as pltpu


def _round_up(x, m):
    return (x + m - 1) // m * m


def ncf_kernel(x_ref, w1p_ref, b1_ref, w2_ref, b2_ref, wog_ref, wom_ref,
               bo_ref, out_ref, *, d):
    # Packed, lane-dense embedding tile: [ugmf | igmf | umlp | imlp]  (tb, 4d)
    x = x_ref[...]

    # MLP branch without the concat:
    #   concat(umlp, imlp) @ w1 == x_packed @ w1p    (w1p rows [0:2d] are 0)
    h1 = jnp.dot(x, w1p_ref[...], preferred_element_type=jnp.float32) + b1_ref[...]
    h1 = jnp.maximum(h1, 0.0)
    h2 = jnp.dot(h1, w2_ref[...], preferred_element_type=jnp.float32) + b2_ref[...]
    h2 = jnp.maximum(h2, 0.0)                         # (tb, H2)

    # GMF branch: elementwise product of the two GMF embedding slices.
    ugmf = x_ref[:, :d]                               # (tb, d)
    igmf = x_ref[:, d:2 * d]                          # (tb, d)
    gmf = ugmf * igmf                                 # (tb, d)

    # Final 1-unit projection: contract the feature axis so the logits are
    # produced directly in lane-dense (1, tb) layout (no (tb, 1) column).
    dnums = (((1,), (1,)), ((), ()))                  # contract last dims
    logit = (lax.dot_general(wog_ref[...], gmf, dnums,
                             preferred_element_type=jnp.float32)
             + lax.dot_general(wom_ref[...], h2, dnums,
                               preferred_element_type=jnp.float32)
             + bo_ref[0, 0])                          # (1, tb)

    out_ref[...] = jax.nn.sigmoid(logit)


def _choose_tile(batch, tile_b):
    rows = _round_up(batch, 8)
    tb = min(tile_b, rows)
    if rows >= 16:
        # Keep >= 2 grid steps so v7x's two TensorCores both get work.
        tb = min(tb, _round_up((rows + 1) // 2, 8))
    return max(tb, 8)


@functools.partial(jax.jit, static_argnames=("tile_b",))
def ncf_forward(user_input, item_input, params, *, tile_b=4096):
    """Embedding gathers in plain JAX + one batch-tiled Pallas kernel."""
    d = params["user_emb_gmf"].shape[1]

    ugmf = params["user_emb_gmf"][user_input]         # (B, d)
    igmf = params["item_emb_gmf"][item_input]         # (B, d)
    umlp = params["user_emb_mlp"][user_input]         # (B, d)
    imlp = params["item_emb_mlp"][item_input]         # (B, d)
    # Single lane-dense slab fed to the kernel.
    x = jnp.concatenate([ugmf, igmf, umlp, imlp], axis=-1)   # (B, 4d)

    B = x.shape[0]
    tb = _choose_tile(B, tile_b)
    Bp = _round_up(B, tb)
    if Bp != B:
        x = jnp.pad(x, ((0, Bp - B), (0, 0)))
    g = Bp // tb

    w1, b1 = params["w1"], params["b1"]               # (2d, H1), (1, H1)
    w2, b2 = params["w2"], params["b2"]               # (H1, H2), (1, H2)
    wo, bo = params["wo"], params["bo"]               # (d+H2, 1), (1, 1)
    h1n, h2n = w1.shape[1], w2.shape[1]

    # Zero-pad w1 so x_packed @ w1p == concat(umlp, imlp) @ w1 (GMF lanes * 0).
    w1p = jnp.concatenate([jnp.zeros((2 * d, h1n), w1.dtype), w1], axis=0)
    wog = wo[:d].reshape(1, d)                        # GMF rows of fc_output
    wom = wo[d:].reshape(1, h2n)                      # MLP rows of fc_output

    def rep(shape):
        # Replicated (grid-invariant) weight block.
        return pl.BlockSpec(shape, lambda i: (0, 0))

    # Rough VMEM budget: double-buffered packed input + intermediates + weights.
    vmem_bytes = 4 * (3 * tb * 4 * d + tb * (h1n + h2n) + 8 * tb
                      + 4 * d * h1n + h1n * h2n + 4 * d + 3 * h2n + 2 * h1n)
    vmem_limit = int(min(max(2 * vmem_bytes, 16 * 1024 * 1024),
                         48 * 1024 * 1024))

    out = pl.pallas_call(
        functools.partial(ncf_kernel, d=d),
        out_shape=jax.ShapeDtypeStruct((g, tb), jnp.float32),
        grid=(g,),
        in_specs=[
            pl.BlockSpec((tb, 4 * d), lambda i: (i, 0)),       # packed embeddings
            rep((4 * d, h1n)), rep((1, h1n)),                  # w1p, b1
            rep((h1n, h2n)), rep((1, h2n)),                    # w2, b2
            rep((1, d)), rep((1, h2n)),                        # wo gmf/mlp rows
            pl.BlockSpec(memory_space=pltpu.MemorySpace.SMEM), # bo scalar
        ],
        out_specs=pl.BlockSpec((1, tb), lambda i: (i, 0)),     # lane-dense rows
        compiler_params=pltpu.CompilerParams(
            dimension_semantics=("parallel",),
            vmem_limit_bytes=vmem_limit),
    )(x, w1p, b1, w2, b2, wog, wom, bo)

    return out.reshape(Bp, 1)[:B]


def init_params(key, num_users, num_items, embedding_dim, hidden_layers):
    assert len(hidden_layers) == 2, "kernel is specialized to 2 hidden layers"
    ks = jax.random.split(key, 10)
    d = embedding_dim
    h1, h2 = hidden_layers
    scale = 0.05
    return {
        "user_emb_gmf": scale * jax.random.normal(ks[0], (num_users, d), jnp.float32),
        "item_emb_gmf": scale * jax.random.normal(ks[1], (num_items, d), jnp.float32),
        "user_emb_mlp": scale * jax.random.normal(ks[2], (num_users, d), jnp.float32),
        "item_emb_mlp": scale * jax.random.normal(ks[3], (num_items, d), jnp.float32),
        # Linear weights stored as (in_features, out_features); biases as (1, out).
        "w1": scale * jax.random.normal(ks[4], (2 * d, h1), jnp.float32),
        "b1": scale * jax.random.normal(ks[5], (1, h1), jnp.float32),
        "w2": scale * jax.random.normal(ks[6], (h1, h2), jnp.float32),
        "b2": scale * jax.random.normal(ks[7], (1, h2), jnp.float32),
        "wo": scale * jax.random.normal(ks[8], (d + h2, 1), jnp.float32),
        "bo": scale * jax.random.normal(ks[9], (1, 1), jnp.float32),
    }


def ncf_reference(user_input, item_input, params):
    """Pure-JAX reference mirroring the PyTorch forward."""
    ugmf = params["user_emb_gmf"][user_input]
    igmf = params["item_emb_gmf"][item_input]
    gmf = ugmf * igmf
    umlp = params["user_emb_mlp"][user_input]
    imlp = params["item_emb_mlp"][item_input]
    x = jnp.concatenate([umlp, imlp], axis=-1)
    h1 = jnp.maximum(x @ params["w1"] + params["b1"], 0.0)
    h2 = jnp.maximum(h1 @ params["w2"] + params["b2"], 0.0)
    z = jnp.concatenate([gmf, h2], axis=-1)
    return jax.nn.sigmoid(z @ params["wo"] + params["bo"])


if __name__ == "__main__":
    num_users, num_items = 10, 12
    embedding_dim = 32
    hidden_layers = (64, 32)

    key = jax.random.PRNGKey(0)
    pkey, ukey, ikey = jax.random.split(key, 3)
    params = init_params(pkey, num_users, num_items, embedding_dim, hidden_layers)

    # Case 1: tiny batch (single grid step).
    batch1 = 8
    u1 = jax.random.randint(ukey, (batch1,), 0, num_users, dtype=jnp.int32)
    i1 = jax.random.randint(ikey, (batch1,), 0, num_items, dtype=jnp.int32)
    out1 = jax.block_until_ready(ncf_forward(u1, i1, params))
    ref1 = jax.block_until_ready(ncf_reference(u1, i1, params))
    assert out1.shape == (batch1, 1)
    assert jnp.allclose(out1, ref1, atol=1e-5, rtol=1e-5), (out1, ref1)

    # Case 2: batch not divisible by the tile -> multi-step grid + padding path.
    batch2 = 200
    u2 = jax.random.randint(jax.random.PRNGKey(1), (batch2,), 0, num_users, dtype=jnp.int32)
    i2 = jax.random.randint(jax.random.PRNGKey(2), (batch2,), 0, num_items, dtype=jnp.int32)
    out2 = jax.block_until_ready(ncf_forward(u2, i2, params, tile_b=64))
    ref2 = jax.block_until_ready(ncf_reference(u2, i2, params))
    assert out2.shape == (batch2, 1)
    assert jnp.allclose(out2, ref2, atol=1e-5, rtol=1e-5), (out2, ref2)

    # Case 3: default tile path (auto-capped so the grid keeps >= 2 steps).
    out3 = jax.block_until_ready(ncf_forward(u2, i2, params))
    assert out3.shape == (batch2, 1)
    assert jnp.allclose(out3, ref2, atol=1e-5, rtol=1e-5), (out3, ref2)

    print("KERNEL_OK")
</pallas_src>

<mosaic_0001>
module attributes {stable_mosaic.version = 11 : i64} {
  func.func @ncf_kernel(%arg0: i32, %arg1: memref<8x128xf32, #tpu.memory_space<vmem>>, %arg2: memref<128x64xf32, #tpu.memory_space<vmem>>, %arg3: memref<1x64xf32, #tpu.memory_space<vmem>>, %arg4: memref<64x32xf32, #tpu.memory_space<vmem>>, %arg5: memref<1x32xf32, #tpu.memory_space<vmem>>, %arg6: memref<1x32xf32, #tpu.memory_space<vmem>>, %arg7: memref<1x32xf32, #tpu.memory_space<vmem>>, %arg8: memref<1x1xf32, #tpu.memory_space<smem>>, %arg9: memref<1x8xf32, #tpu.memory_space<vmem>>) attributes {dimension_semantics = [#tpu.dimension_semantics<parallel>], iteration_bounds = array<i64: 1>, scalar_prefetch = 0 : i64, scratch_operands = 0 : i64, tpu.core_type = #tpu.core_type<tc>, window_params = [{transform_indices = @transform_0, window_bounds = array<i64: 8, 128>}, {pipeline_mode = #tpu.pipeline_mode<synchronous>, transform_indices = @transform_1, window_bounds = array<i64: 128, 64>}, {pipeline_mode = #tpu.pipeline_mode<synchronous>, transform_indices = @transform_2, window_bounds = array<i64: 1, 64>}, {pipeline_mode = #tpu.pipeline_mode<synchronous>, transform_indices = @transform_3, window_bounds = array<i64: 64, 32>}, {pipeline_mode = #tpu.pipeline_mode<synchronous>, transform_indices = @transform_4, window_bounds = array<i64: 1, 32>}, {pipeline_mode = #tpu.pipeline_mode<synchronous>, transform_indices = @transform_5, window_bounds = array<i64: 1, 32>}, {pipeline_mode = #tpu.pipeline_mode<synchronous>, transform_indices = @transform_6, window_bounds = array<i64: 1, 32>}, {transform_indices = @transform_7, window_bounds = array<i64: 1, 1>}, {transform_indices = @transform_8, window_bounds = array<i64: 1, 8>}]} {
    %c0 = arith.constant 0 : index
    %c0_0 = arith.constant 0 : index
    %0 = vector.load %arg1[%c0, %c0_0] : memref<8x128xf32, #tpu.memory_space<vmem>>, vector<8x128xf32>
    %c0_1 = arith.constant 0 : index
    %c0_2 = arith.constant 0 : index
    %1 = vector.load %arg2[%c0_1, %c0_2] : memref<128x64xf32, #tpu.memory_space<vmem>>, vector<128x64xf32>
    %cst = arith.constant dense<0.000000e+00> : vector<8x64xf32>
    %2 = tpu.matmul %0, %1, %cst {dimension_numbers = #tpu.dot_dimension_numbers<[1], [0], [0], [1], [0, 0, 1, 1], [], []>} : vector<8x128xf32>, vector<128x64xf32>, vector<8x64xf32> -> vector<8x64xf32>
    %c0_3 = arith.constant 0 : index
    %c0_4 = arith.constant 0 : index
    %3 = vector.load %arg3[%c0_3, %c0_4] : memref<1x64xf32, #tpu.memory_space<vmem>>, vector<1x64xf32>
    %4 = vector.broadcast %3 : vector<1x64xf32> to vector<8x64xf32>
    %5 = arith.addf %2, %4 : vector<8x64xf32>
    %cst_5 = arith.constant 0.000000e+00 : f32
    %6 = vector.broadcast %cst_5 : f32 to vector<8x64xf32>
    %7 = arith.maximumf %5, %6 : vector<8x64xf32>
    %c0_6 = arith.constant 0 : index
    %c0_7 = arith.constant 0 : index
    %8 = vector.load %arg4[%c0_6, %c0_7] : memref<64x32xf32, #tpu.memory_space<vmem>>, vector<64x32xf32>
    %cst_8 = arith.constant dense<0.000000e+00> : vector<8x32xf32>
    %9 = tpu.matmul %7, %8, %cst_8 {dimension_numbers = #tpu.dot_dimension_numbers<[1], [0], [0], [1], [0, 0, 1, 1], [], []>} : vector<8x64xf32>, vector<64x32xf32>, vector<8x32xf32> -> vector<8x32xf32>
    %c0_9 = arith.constant 0 : index
    %c0_10 = arith.constant 0 : index
    %10 = vector.load %arg5[%c0_9, %c0_10] : memref<1x32xf32, #tpu.memory_space<vmem>>, vector<1x32xf32>
    %11 = vector.broadcast %10 : vector<1x32xf32> to vector<8x32xf32>
    %12 = arith.addf %9, %11 : vector<8x32xf32>
    %cst_11 = arith.constant 0.000000e+00 : f32
    %13 = vector.broadcast %cst_11 : f32 to vector<8x32xf32>
    %14 = arith.maximumf %12, %13 : vector<8x32xf32>
    %c0_12 = arith.constant 0 : index
    %c0_13 = arith.constant 0 : index
    %15 = vector.load %arg1[%c0_12, %c0_13] : memref<8x128xf32, #tpu.memory_space<vmem>>, vector<8x32xf32>
    %c0_14 = arith.constant 0 : index
    %c32 = arith.constant 32 : index
    %16 = vector.load %arg1[%c0_14, %c32] : memref<8x128xf32, #tpu.memory_space<vmem>>, vector<8x32xf32>
    %17 = arith.mulf %15, %16 : vector<8x32xf32>
    %c0_15 = arith.constant 0 : index
    %c0_16 = arith.constant 0 : index
    %18 = vector.load %arg6[%c0_15, %c0_16] : memref<1x32xf32, #tpu.memory_space<vmem>>, vector<1x32xf32>
    %cst_17 = arith.constant dense<0.000000e+00> : vector<1x8xf32>
    %19 = tpu.matmul %18, %17, %cst_17 {dimension_numbers = #tpu.dot_dimension_numbers<[1], [1], [0], [0], [0, 0, 1, 0], [], []>} : vector<1x32xf32>, vector<8x32xf32>, vector<1x8xf32> -> vector<1x8xf32>
    %c0_18 = arith.constant 0 : index
    %c0_19 = arith.constant 0 : index
    %20 = vector.load %arg7[%c0_18, %c0_19] : memref<1x32xf32, #tpu.memory_space<vmem>>, vector<1x32xf32>
    %cst_20 = arith.constant dense<0.000000e+00> : vector<1x8xf32>
    %21 = tpu.matmul %20, %14, %cst_20 {dimension_numbers = #tpu.dot_dimension_numbers<[1], [1], [0], [0], [0, 0, 1, 0], [], []>} : vector<1x32xf32>, vector<8x32xf32>, vector<1x8xf32> -> vector<1x8xf32>
    %22 = arith.addf %19, %21 : vector<1x8xf32>
    %c0_21 = arith.constant 0 : index
    %c0_22 = arith.constant 0 : index
    %23 = memref.load %arg8[%c0_21, %c0_22] : memref<1x1xf32, #tpu.memory_space<smem>>
    %24 = vector.broadcast %23 : f32 to vector<1x8xf32>
    %25 = arith.addf %22, %24 : vector<1x8xf32>
    %26 = arith.negf %25 : vector<1x8xf32>
    %27 = math.exp %26 : vector<1x8xf32>
    %cst_23 = arith.constant 1.000000e+00 : f32
    %28 = vector.broadcast %cst_23 : f32 to vector<1x8xf32>
    %29 = arith.addf %28, %27 : vector<1x8xf32>
    %30 = arith.divf %28, %29 : vector<1x8xf32>
    %c0_24 = arith.constant 0 : index
    %c0_25 = arith.constant 0 : index
    %31 = vector.load %arg9[%c0_24, %c0_25] : memref<1x8xf32, #tpu.memory_space<vmem>>, vector<1x8xf32>
    tpu.vector_store %arg9[%c0_24, %c0_25], %30 {strides = array<i32>} : memref<1x8xf32, #tpu.memory_space<vmem>>, vector<1x8xf32>,
    return
  }
  func.func @transform_0(%arg0: i32) -> (i32, i32) {
    %c0_i32 = arith.constant 0 : i32
    %c0_i32_0 = arith.constant 0 : i32
    return %arg0, %c0_i32 : i32, i32
  }
  func.func @transform_1(%arg0: i32) -> (i32, i32) {
    %c0_i32 = arith.constant 0 : i32
    %c0_i32_0 = arith.constant 0 : i32
    %c0_i32_1 = arith.constant 0 : i32
    return %c0_i32, %c0_i32_0 : i32, i32
  }
  func.func @transform_2(%arg0: i32) -> (i32, i32) {
    %c0_i32 = arith.constant 0 : i32
    %c0_i32_0 = arith.constant 0 : i32
    %c0_i32_1 = arith.constant 0 : i32
    return %c0_i32, %c0_i32_0 : i32, i32
  }
  func.func @transform_3(%arg0: i32) -> (i32, i32) {
    %c0_i32 = arith.constant 0 : i32
    %c0_i32_0 = arith.constant 0 : i32
    %c0_i32_1 = arith.constant 0 : i32
    return %c0_i32, %c0_i32_0 : i32, i32
  }
  func.func @transform_4(%arg0: i32) -> (i32, i32) {
    %c0_i32 = arith.constant 0 : i32
    %c0_i32_0 = arith.constant 0 : i32
    %c0_i32_1 = arith.constant 0 : i32
    return %c0_i32, %c0_i32_0 : i32, i32
  }
  func.func @transform_5(%arg0: i32) -> (i32, i32) {
    %c0_i32 = arith.constant 0 : i32
    %c0_i32_0 = arith.constant 0 : i32
    %c0_i32_1 = arith.constant 0 : i32
    return %c0_i32, %c0_i32_0 : i32, i32
  }
  func.func @transform_6(%arg0: i32) -> (i32, i32) {
    %c0_i32 = arith.constant 0 : i32
    %c0_i32_0 = arith.constant 0 : i32
    %c0_i32_1 = arith.constant 0 : i32
    return %c0_i32, %c0_i32_0 : i32, i32
  }
  func.func @transform_7(%arg0: i32) -> (i32, i32) {
    %c0_i32 = arith.constant 0 : i32
    %c0_i32_0 = arith.constant 0 : i32
    %c0_i32_1 = arith.constant 0 : i32
    return %c0_i32, %c0_i32_0 : i32, i32
  }
  func.func @transform_8(%arg0: i32) -> (i32, i32) {
    %c0_i32 = arith.constant 0 : i32
    %c0_i32_0 = arith.constant 0 : i32
    return %arg0, %c0_i32 : i32, i32
  }
}

</mosaic_0001>

<llo_original>
// kernel: ncf_forward.1
$region0: #{ncf_forward.1}
  #allocation0 [shape = 'u32[]', space=smem, size = 0x4, offset = 0x4, fixed_abs, tag = 'smem constant byte address 0x4 - core index']
  #allocation1 [shape = 'u32[144,128]{1,0:T(1,128)}', space=vmem, size = 0x12000, scoped, tag = 'internal scratch']
  #allocation2 [shape = 'f32[1,1]{1,0:T(1,128)S(6)}', space=smem, size = 0x200, scoped, tag = 'scoped memory for ncf_forward.1']
  %s0 = inlined_call_operand.vmem [shape: f32[8,128], index: 0, kind: input, shape index: {}]
  %s1 = inlined_call_operand.vmem [shape: f32[128,64], index: 1, kind: input, shape index: {}]
  %s2 = inlined_call_operand.vmem [shape: f32[1,64], index: 2, kind: input, shape index: {}]
  %s3 = inlined_call_operand.vmem [shape: f32[64,32], index: 3, kind: input, shape index: {}]
  %s4 = inlined_call_operand.vmem [shape: f32[1,32], index: 4, kind: input, shape index: {}]
  %s5 = inlined_call_operand.vmem [shape: f32[1,32], index: 5, kind: input, shape index: {}]
  %s6 = inlined_call_operand.vmem [shape: f32[1,32], index: 6, kind: input, shape index: {}]
  %s7 = inlined_call_operand.<no memory space> [shape: f32[1,1], index: 7, kind: input, shape index: {}]
  %s8 = inlined_call_operand.hbm [shape: f32[1,8], index: 8, kind: output, shape index: {}]
  %s9 = sld [smem:[#allocation0]]
  $region42: #{ncf_forward.1} parent=0
    _
  %s11 = ssub.s32 1, %s9
  %s12 = scalar_select 0, %s11, %s9
  %13 = sst [smem:[#allocation2]] %s7
  $region1: #{ncf_forward.1} parent=0
    #allocation3 [shape = 'u8[512]{0}', space=vmem, size = 0x400, scoped, tag = 'output window, operand 0, single buffered']
    #allocation4 [shape = 's32[1]{0}', space=sflag, size = 0x4, scoped, tag = 'scoped memory for ncf_forward.1']
    %14 = vsyncpa [#allocation4], 0
    // Predicated region
    $region2: #{ncf_forward.1} parent=1 // pred_check
      _
    $region3: #{ncf_forward.1} parent=1 // pred_check_branch
      %16 = sbr.rel (0) target = $region5
    $region4: #{ncf_forward.1} parent=1 // pred_region
      _
    $region5: #{ncf_forward.1} parent=1 // pred_fallthru
      _
    // Predicated region
    $region6: #{ncf_forward.1} parent=1 // pred_check
      _
    $region7: #{ncf_forward.1} parent=1 // pred_check_branch
      %18 = sbr.rel (0) target = $region9
    $region8: #{ncf_forward.1} parent=1 // pred_region
      _
    $region9: #{ncf_forward.1} parent=1 // pred_fallthru
      _
    // Predicated region
    $region10: #{ncf_forward.1} parent=1 // pred_check
      _
    $region11: #{ncf_forward.1} parent=1 // pred_check_branch
      %20 = sbr.rel (0) target = $region13
    $region12: #{ncf_forward.1} parent=1 // pred_region
      _
    $region13: #{ncf_forward.1} parent=1 // pred_fallthru
      _
    // Predicated region
    $region14: #{ncf_forward.1} parent=1 // pred_check
      _
    $region15: #{ncf_forward.1} parent=1 // pred_check_branch
      %22 = sbr.rel (0) target = $region17
    $region16: #{ncf_forward.1} parent=1 // pred_region
      _
    $region17: #{ncf_forward.1} parent=1 // pred_fallthru
      _
    // Predicated region
    $region18: #{ncf_forward.1} parent=1 // pred_check
      _
    $region19: #{ncf_forward.1} parent=1 // pred_check_branch
      %24 = sbr.rel (0) target = $region21
    $region20: #{ncf_forward.1} parent=1 // pred_region
      _
    $region21: #{ncf_forward.1} parent=1 // pred_fallthru
      _
    // Predicated region
    $region22: #{ncf_forward.1} parent=1 // pred_check
      _
    $region23: #{ncf_forward.1} parent=1 // pred_check_branch
      %26 = sbr.rel (0) target = $region25
    $region24: #{ncf_forward.1} parent=1 // pred_region
      _
    $region25: #{ncf_forward.1} parent=1 // pred_fallthru
      _
    // Predicated region
    $region26: #{ncf_forward.1} parent=1 // pred_check
      _
    $region27: #{ncf_forward.1} parent=1 // pred_check_branch
      %28 = sbr.rel (0) target = $region29
    $region28: #{ncf_forward.1} parent=1 // pred_region
      _
    $region29: #{ncf_forward.1} parent=1 // pred_fallthru
      _
    // Predicated region
    $region30: #{ncf_forward.1} parent=1 // pred_check
      _
    $region31: #{ncf_forward.1} parent=1 // pred_check_branch
      %30 = sbr.rel (0) target = $region33
    $region32: #{ncf_forward.1} parent=1 // pred_region
      _
    $region33: #{ncf_forward.1} parent=1 // pred_fallthru
      _
    %v31 = vld [vmem:[%s0] sm:$0xff]
    %v32 = vld [vmem:[%s1] sm:$0xff]
    %v33 = vld [vmem:[%s1 + $0x8] sm:$0xff]
    %v34 = vld [vmem:[%s1 + $0x10] sm:$0xff]
    %v35 = vld [vmem:[%s1 + $0x18] sm:$0xff]
    %v36 = vld [vmem:[%s1 + $0x20] sm:$0xff]
    %v37 = vld [vmem:[%s1 + $0x28] sm:$0xff]
    %v38 = vld [vmem:[%s1 + $0x30] sm:$0xff]
    %v39 = vld [vmem:[%s1 + $0x38] sm:$0xff]
    %v40 = vld [vmem:[%s1 + $0x40] sm:$0xff]
    %v41 = vld [vmem:[%s1 + $0x48] sm:$0xff]
    %v42 = vld [vmem:[%s1 + $0x50] sm:$0xff]
    %v43 = vld [vmem:[%s1 + $0x58] sm:$0xff]
    %v44 = vld [vmem:[%s1 + $0x60] sm:$0xff]
    %v45 = vld [vmem:[%s1 + $0x68] sm:$0xff]
    %v46 = vld [vmem:[%s1 + $0x70] sm:$0xff]
    %v47 = vld [vmem:[%s1 + $0x78] sm:$0xff]
    %v48 = vld [vmem:[%s2] sm:$0x1]
    %v50 = vlaneseq
    %v51 = vshrl.u32 %v50, 7
    %v52 = vsub.s32 0, %v51
    %v53 = vrot.slane %v48, %v52
    %55 = vmatprep.subr.mxu0 0.0
    %56 = vmatpush1.msra.mxu0 %v47
    %57 = vmatprep.subr.mxu0 0.0
    %58 = vmatpush1.msra.mxu0 %v46
    %59 = vmatprep.subr.mxu0 0.0
    %60 = vmatpush1.msra.mxu0 %v45
    %61 = vmatprep.subr.mxu0 0.0
    %62 = vmatpush1.msra.mxu0 %v44
    %63 = vmatprep.subr.mxu0 0.0
    %64 = vmatpush1.msra.mxu0 %v43
    %65 = vmatprep.subr.mxu0 0.0
    %66 = vmatpush1.msra.mxu0 %v42
    %67 = vmatprep.subr.mxu0 0.0
    %68 = vmatpush1.msra.mxu0 %v41
    %69 = vmatprep.subr.mxu0 0.0
    %70 = vmatpush1.msra.mxu0 %v40
    %71 = vmatprep.subr.mxu0 0.0
    %72 = vmatpush1.msra.mxu0 %v39
    %73 = vmatprep.subr.mxu0 0.0
    %74 = vmatpush1.msra.mxu0 %v38
    %75 = vmatprep.subr.mxu0 0.0
    %76 = vmatpush1.msra.mxu0 %v37
    %77 = vmatprep.subr.mxu0 0.0
    %78 = vmatpush1.msra.mxu0 %v36
    %79 = vmatprep.subr.mxu0 0.0
    %80 = vmatpush1.msra.mxu0 %v35
    %81 = vmatprep.subr.mxu0 0.0
    %82 = vmatpush1.msra.mxu0 %v34
    %83 = vmatprep.subr.mxu0 0.0
    %84 = vmatpush1.msra.mxu0 %v33
    %85 = vmatprep.subr.mxu0 0.0
    %86 = vmatpush1.msra.mxu0 %v32
    %87 = vmatprep.subr.mxu0 0.0
    %88 = vmatpush2.msra.mxu0 0.0
    %89 = vmatprep.subr.mxu0 0.0
    %90 = vmatpush2.msra.mxu0 0.0
    %91 = vmatprep.subr.mxu0 0.0
    %92 = vmatpush2.msra.mxu0 0.0
    %93 = vmatprep.subr.mxu0 0.0
    %94 = vmatpush2.msra.mxu0 0.0
    %95 = vmatprep.subr.mxu0 0.0
    %96 = vmatpush2.msra.mxu0 0.0
    %97 = vmatprep.subr.mxu0 0.0
    %98 = vmatpush2.msra.mxu0 0.0
    %99 = vmatprep.subr.mxu0 0.0
    %100 = vmatpush2.msra.mxu0 0.0
    %101 = vmatprep.subr.mxu0 0.0
    %102 = vmatpush2.msra.mxu0 0.0
    %103 = vmatprep.subr.mxu0 0.0
    %104 = vmatpush2.msra.mxu0 0.0
    %105 = vmatprep.subr.mxu0 0.0
    %106 = vmatpush2.msra.mxu0 0.0
    %107 = vmatprep.subr.mxu0 0.0
    %108 = vmatpush2.msra.mxu0 0.0
    %109 = vmatprep.subr.mxu0 0.0
    %110 = vmatpush2.msra.mxu0 0.0
    %111 = vmatprep.subr.mxu0 0.0
    %112 = vmatpush2.msra.mxu0 0.0
    %113 = vmatprep.subr.mxu0 0.0
    %114 = vmatpush2.msra.mxu0 0.0
    %115 = vmatprep.subr.mxu0 0.0
    %116 = vmatpush2.msra.mxu0 0.0
    %117 = vmatprep.subr.mxu0 0.0
    %118 = vmatpush2.msra.mxu0 0.0
    %119 = vmatprep.mubr.f32.mxu0 0.0
    %120 = vmatmul.mubr.f32.gmra.mxu0 %v31
    %v121 = vpop.f32.mrf.mxu0
    %v122 = vadd.f32 %v53, %v121
    %v123 = vpop.f32.mrf.mxu0
    %124 = vdwg.mxu0
    %v125 = vmax.f32 %v122, 0.0
    %v126 = vld [vmem:[%s3] sm:$0xff]
    %v127 = vld [vmem:[%s3 + $0x8] sm:$0xff]
    %v128 = vld [vmem:[%s3 + $0x10] sm:$0xff]
    %v129 = vld [vmem:[%s3 + $0x18] sm:$0xff]
    %v130 = vld [vmem:[%s3 + $0x20] sm:$0xff]
    %v131 = vld [vmem:[%s3 + $0x28] sm:$0xff]
    %v132 = vld [vmem:[%s3 + $0x30] sm:$0xff]
    %v133 = vld [vmem:[%s3 + $0x38] sm:$0xff]
    %v134 = vld [vmem:[%s4] sm:$0x1]
    %v136 = vlaneseq
    %v137 = vshrl.u32 %v136, 7
    %v138 = vsub.s32 0, %v137
    %v139 = vrot.slane %v134, %v138
    %vm141 = vcmask 523264
    %v143 = vsel %vm141, %v125, 0
    %145 = vmatprep.subr.mxu0 0.0
    %146 = vmatpush1.msra.mxu0 0.0
    %147 = vmatprep.subr.mxu0 0.0
    %148 = vmatpush1.msra.mxu0 0.0
    %149 = vmatprep.subr.mxu0 0.0
    %150 = vmatpush1.msra.mxu0 0.0
    %151 = vmatprep.subr.mxu0 0.0
    %152 = vmatpush1.msra.mxu0 0.0
    %153 = vmatprep.subr.mxu0 0.0
    %154 = vmatpush1.msra.mxu0 0.0
    %155 = vmatprep.subr.mxu0 0.0
    %156 = vmatpush1.msra.mxu0 0.0
    %157 = vmatprep.subr.mxu0 0.0
    %158 = vmatpush1.msra.mxu0 0.0
    %159 = vmatprep.subr.mxu0 0.0
    %160 = vmatpush1.msra.mxu0 0.0
    %161 = vmatprep.subr.mxu0 0.0
    %162 = vmatpush1.msra.mxu0 %v133
    %163 = vmatprep.subr.mxu0 0.0
    %164 = vmatpush1.msra.mxu0 %v132
    %165 = vmatprep.subr.mxu0 0.0
    %166 = vmatpush1.msra.mxu0 %v131
    %167 = vmatprep.subr.mxu0 0.0
    %168 = vmatpush1.msra.mxu0 %v130
    %169 = vmatprep.subr.mxu0 0.0
    %170 = vmatpush1.msra.mxu0 %v129
    %171 = vmatprep.subr.mxu0 0.0
    %172 = vmatpush1.msra.mxu0 %v128
    %173 = vmatprep.subr.mxu0 0.0
    %174 = vmatpush1.msra.mxu0 %v127
    %175 = vmatprep.subr.mxu0 0.0
    %176 = vmatpush1.msra.mxu0 %v126
    %177 = vmatprep.subr.mxu0 0.0
    %178 = vmatpush2.msra.mxu0 0.0
    %179 = vmatprep.subr.mxu0 0.0
    %180 = vmatpush2.msra.mxu0 0.0
    %181 = vmatprep.subr.mxu0 0.0
    %182 = vmatpush2.msra.mxu0 0.0
    %183 = vmatprep.subr.mxu0 0.0
    %184 = vmatpush2.msra.mxu0 0.0
    %185 = vmatprep.subr.mxu0 0.0
    %186 = vmatpush2.msra.mxu0 0.0
    %187 = vmatprep.subr.mxu0 0.0
    %188 = vmatpush2.msra.mxu0 0.0
    %189 = vmatprep.subr.mxu0 0.0
    %190 = vmatpush2.msra.mxu0 0.0
    %191 = vmatprep.subr.mxu0 0.0
    %192 = vmatpush2.msra.mxu0 0.0
    %193 = vmatprep.subr.mxu0 0.0
    %194 = vmatpush2.msra.mxu0 0.0
    %195 = vmatprep.subr.mxu0 0.0
    %196 = vmatpush2.msra.mxu0 0.0
    %197 = vmatprep.subr.mxu0 0.0
    %198 = vmatpush2.msra.mxu0 0.0
    %199 = vmatprep.subr.mxu0 0.0
    %200 = vmatpush2.msra.mxu0 0.0
    %201 = vmatprep.subr.mxu0 0.0
    %202 = vmatpush2.msra.mxu0 0.0
    %203 = vmatprep.subr.mxu0 0.0
    %204 = vmatpush2.msra.mxu0 0.0
    %205 = vmatprep.subr.mxu0 0.0
    %206 = vmatpush2.msra.mxu0 0.0
    %207 = vmatprep.subr.mxu0 0.0
    %208 = vmatpush2.msra.mxu0 0.0
    %209 = vmatprep.mubr.f32.mxu0 0.0
    %210 = vmatmul.mubr.f32.gmra.mxu0 %v143
    %v211 = vpop.f32.mrf.mxu0
    %v212 = vadd.f32 %v139, %v211
    %v213 = vpop.f32.mrf.mxu0
    %214 = vdwg.mxu0
    %v215 = vmax.f32 %v212, 0.0
    %217 = vrot.lane.b32.xlu0 %v31, 96
    %v218 = vpop.permute.xlu0 %217
    %v220 = vmul.f32 %v31, %v218
    %v221 = vld [vmem:[%s5] sm:$0x1]
    %v222 = vld [vmem:[%s6] sm:$0x1]
    %vm223 = vcmask 261120
    %v225 = vsel %vm223, %v222, 0
    %v228 = vsel %vm223, %v215, 0
    %230 = vmatprep.subr.mxu0 0.0
    %231 = vmatpush1.xpose.msra.mxu0 0.0
    %232 = vmatprep.subr.mxu0 0.0
    %233 = vmatpush1.xpose.msra.mxu0 0.0
    %234 = vmatprep.subr.mxu0 0.0
    %235 = vmatpush1.xpose.msra.mxu0 0.0
    %236 = vmatprep.subr.mxu0 0.0
    %237 = vmatpush1.xpose.msra.mxu0 0.0
    %238 = vmatprep.subr.mxu0 0.0
    %239 = vmatpush1.xpose.msra.mxu0 0.0
    %240 = vmatprep.subr.mxu0 0.0
    %241 = vmatpush1.xpose.msra.mxu0 0.0
    %242 = vmatprep.subr.mxu0 0.0
    %243 = vmatpush1.xpose.msra.mxu0 0.0
    %244 = vmatprep.subr.mxu0 0.0
    %245 = vmatpush1.xpose.msra.mxu0 0.0
    %246 = vmatprep.subr.mxu0 0.0
    %247 = vmatpush1.xpose.msra.mxu0 0.0
    %248 = vmatprep.subr.mxu0 0.0
    %249 = vmatpush1.xpose.msra.mxu0 0.0
    %250 = vmatprep.subr.mxu0 0.0
    %251 = vmatpush1.xpose.msra.mxu0 0.0
    %252 = vmatprep.subr.mxu0 0.0
    %253 = vmatpush1.xpose.msra.mxu0 0.0
    %254 = vmatprep.subr.mxu0 0.0
    %255 = vmatpush1.xpose.msra.mxu0 0.0
    %256 = vmatprep.subr.mxu0 0.0
    %257 = vmatpush1.xpose.msra.mxu0 0.0
    %258 = vmatprep.subr.mxu0 0.0
    %259 = vmatpush1.xpose.msra.mxu0 0.0
    %260 = vmatprep.subr.mxu0 0.0
    %261 = vmatpush1.xpose.msra.mxu0 %v228
    %262 = vmatprep.subr.mxu0 0.0
    %263 = vmatpush2.xpose.msra.mxu0 0.0
    %264 = vmatprep.subr.mxu0 0.0
    %265 = vmatpush2.xpose.msra.mxu0 0.0
    %266 = vmatprep.subr.mxu0 0.0
    %267 = vmatpush2.xpose.msra.mxu0 0.0
    %268 = vmatprep.subr.mxu0 0.0
    %269 = vmatpush2.xpose.msra.mxu0 0.0
    %270 = vmatprep.subr.mxu0 0.0
    %271 = vmatpush2.xpose.msra.mxu0 0.0
    %272 = vmatprep.subr.mxu0 0.0
    %273 = vmatpush2.xpose.msra.mxu0 0.0
    %274 = vmatprep.subr.mxu0 0.0
    %275 = vmatpush2.xpose.msra.mxu0 0.0
    %276 = vmatprep.subr.mxu0 0.0
    %277 = vmatpush2.xpose.msra.mxu0 0.0
    %278 = vmatprep.subr.mxu0 0.0
    %279 = vmatpush2.xpose.msra.mxu0 0.0
    %280 = vmatprep.subr.mxu0 0.0
    %281 = vmatpush2.xpose.msra.mxu0 0.0
    %282 = vmatprep.subr.mxu0 0.0
    %283 = vmatpush2.xpose.msra.mxu0 0.0
    %284 = vmatprep.subr.mxu0 0.0
    %285 = vmatpush2.xpose.msra.mxu0 0.0
    %286 = vmatprep.subr.mxu0 0.0
    %287 = vmatpush2.xpose.msra.mxu0 0.0
    %288 = vmatprep.subr.mxu0 0.0
    %289 = vmatpush2.xpose.msra.mxu0 0.0
    %290 = vmatprep.subr.mxu0 0.0
    %291 = vmatpush2.xpose.msra.mxu0 0.0
    %292 = vmatprep.subr.mxu0 0.0
    %293 = vmatpush2.xpose.msra.mxu0 0.0
    %294 = vmatprep.mubr.f32.mxu0 0.0
    %295 = vmatmul.mubr.f32.gmra.mxu0 %v225
    %v296 = vpop.f32.mrf.mxu0
    %v297 = vadd.f32 0.0, %v296
    %v298 = vpop.f32.mrf.mxu0
    %299 = vdwg.mxu0
    %v301 = vsel %vm223, %v221, 0
    %v304 = vsel %vm223, %v220, 0
    %306 = vmatprep.subr.mxu0 0.0
    %307 = vmatpush1.xpose.msra.mxu0 0.0
    %308 = vmatprep.subr.mxu0 0.0
    %309 = vmatpush1.xpose.msra.mxu0 0.0
    %310 = vmatprep.subr.mxu0 0.0
    %311 = vmatpush1.xpose.msra.mxu0 0.0
    %312 = vmatprep.subr.mxu0 0.0
    %313 = vmatpush1.xpose.msra.mxu0 0.0
    %314 = vmatprep.subr.mxu0 0.0
    %315 = vmatpush1.xpose.msra.mxu0 0.0
    %316 = vmatprep.subr.mxu0 0.0
    %317 = vmatpush1.xpose.msra.mxu0 0.0
    %318 = vmatprep.subr.mxu0 0.0
    %319 = vmatpush1.xpose.msra.mxu0 0.0
    %320 = vmatprep.subr.mxu0 0.0
    %321 = vmatpush1.xpose.msra.mxu0 0.0
    %322 = vmatprep.subr.mxu0 0.0
    %323 = vmatpush1.xpose.msra.mxu0 0.0
    %324 = vmatprep.subr.mxu0 0.0
    %325 = vmatpush1.xpose.msra.mxu0 0.0
    %326 = vmatprep.subr.mxu0 0.0
    %327 = vmatpush1.xpose.msra.mxu0 0.0
    %328 = vmatprep.subr.mxu0 0.0
    %329 = vmatpush1.xpose.msra.mxu0 0.0
    %330 = vmatprep.subr.mxu0 0.0
    %331 = vmatpush1.xpose.msra.mxu0 0.0
    %332 = vmatprep.subr.mxu0 0.0
    %333 = vmatpush1.xpose.msra.mxu0 0.0
    %334 = vmatprep.subr.mxu0 0.0
    %335 = vmatpush1.xpose.msra.mxu0 0.0
    %336 = vmatprep.subr.mxu0 0.0
    %337 = vmatpush1.xpose.msra.mxu0 %v304
    %338 = vmatprep.subr.mxu0 0.0
    %339 = vmatpush2.xpose.msra.mxu0 0.0
    %340 = vmatprep.subr.mxu0 0.0
    %341 = vmatpush2.xpose.msra.mxu0 0.0
    %342 = vmatprep.subr.mxu0 0.0
    %343 = vmatpush2.xpose.msra.mxu0 0.0
    %344 = vmatprep.subr.mxu0 0.0
    %345 = vmatpush2.xpose.msra.mxu0 0.0
    %346 = vmatprep.subr.mxu0 0.0
    %347 = vmatpush2.xpose.msra.mxu0 0.0
    %348 = vmatprep.subr.mxu0 0.0
    %349 = vmatpush2.xpose.msra.mxu0 0.0
    %350 = vmatprep.subr.mxu0 0.0
    %351 = vmatpush2.xpose.msra.mxu0 0.0
    %352 = vmatprep.subr.mxu0 0.0
    %353 = vmatpush2.xpose.msra.mxu0 0.0
    %354 = vmatprep.subr.mxu0 0.0
    %355 = vmatpush2.xpose.msra.mxu0 0.0
    %356 = vmatprep.subr.mxu0 0.0
    %357 = vmatpush2.xpose.msra.mxu0 0.0
    %358 = vmatprep.subr.mxu0 0.0
    %359 = vmatpush2.xpose.msra.mxu0 0.0
    %360 = vmatprep.subr.mxu0 0.0
    %361 = vmatpush2.xpose.msra.mxu0 0.0
    %362 = vmatprep.subr.mxu0 0.0
    %363 = vmatpush2.xpose.msra.mxu0 0.0
    %364 = vmatprep.subr.mxu0 0.0
    %365 = vmatpush2.xpose.msra.mxu0 0.0
    %366 = vmatprep.subr.mxu0 0.0
    %367 = vmatpush2.xpose.msra.mxu0 0.0
    %368 = vmatprep.subr.mxu0 0.0
    %369 = vmatpush2.xpose.msra.mxu0 0.0
    %370 = vmatprep.mubr.f32.mxu0 0.0
    %371 = vmatmul.mubr.f32.gmra.mxu0 %v301
    %v372 = vpop.f32.mrf.mxu0
    %v373 = vadd.f32 %v297, %v372
    %v374 = vpop.f32.mrf.mxu0
    %375 = vdwg.mxu0
    %s376 = sld [smem:[#allocation2]]
    %v377 = vstv %s376
    %v378 = vadd.f32 %v373, %v377
    %v379 = vxor.u32 %v378, 2147483648
    %v380 = vmul.f32 %v379, 1.442695
    %v381 = vpow.pop %v380
    %v382 = vadd.f32 %v381, 1.0
    %v383 = vrcp.pop %v382
    %v384 = vmul.f32 1.0, %v383
    %vm385 = vcmask 57344
    %386 = vst.msk [vmem:[#allocation3] sm:$0x1] %vm385, %v384
    // Predicated region
    $region34: #{ncf_forward.1} parent=1 // pred_check
      _
    $region35: #{ncf_forward.1} parent=1 // pred_check_branch
      %388 = sbr.rel (0) target = $region37
    $region36: #{ncf_forward.1} parent=1 // pred_region
      %s390 = ssub.s32 16, 16
      %391 = vsyncadd [#allocation4], %s390
      %s393 = sshll.u32 [#allocation3], 4
      %s394 = int_to_ptr.vmem [resolvable:$true] %s393
      %396 = dma.vmem_to_hbm [thread:$0]  %s394, 16, %s8, [#allocation4]
    $region37: #{ncf_forward.1} parent=1 // pred_fallthru
      _
    // Predicated region
    $region38: #{ncf_forward.1} parent=1 // pred_check
      _
    $region39: #{ncf_forward.1} parent=1 // pred_check_branch
      %398 = sbr.rel (0) target = $region41
    $region40: #{ncf_forward.1} parent=1 // pred_region
      %399 = dma.done [#allocation4], 16
    $region41: #{ncf_forward.1} parent=1 // pred_fallthru
      _
    %400 = vsyncpa [#allocation4], 1

</llo_original>
